<compile_context>
chip_gen: v7x
topology: tpu7x:2x2x1
jax: 0.10.0
libtpu: 0.0.40
codegen_flags: <defaults>
</compile_context>

<pallas_src>
import numpy as np
import jax
import jax.numpy as jnp
from jax.experimental import pallas as pl
from jax.experimental.pallas import tpu as pltpu

_LANES = 128
_TILE_ROWS = 8192                          # (8192, 128) f32 tile = 4 MiB
_TILE_BYTES = _TILE_ROWS * _LANES * 4
_LANE_TILE_COLS = 128 * 1024               # 512 KiB dense per lane tile (1-D fallback)
_SINGLE_BLOCK_MAX_BYTES = 2 * 1024 * 1024  # whole-array-as-one-block threshold
_VMEM_LIMIT_BYTES = 32 * 1024 * 1024       # double-buffered in+out 4 MiB tiles fit


def _itemsize(dt) -> int:
    return np.dtype(dt).itemsize


def _beta_linear_kernel(params_ref, t_ref, o_ref):
    # params_ref: SMEM scalar-prefetch ref holding [start, end] as f32.
    start = params_ref[0]
    end = params_ref[1]
    t = t_ref[...].astype(jnp.float32)      # on-vreg upcast (v5e has no bf16 VALU)
    o_ref[...] = (start + (end - start) * t).astype(o_ref.dtype)   # single FMA


def _cost(n, in_dtype, out_dtype):
    return pl.CostEstimate(
        flops=2 * n,
        transcendentals=0,
        bytes_accessed=n * (_itemsize(in_dtype) + _itemsize(out_dtype)),
    )


def _single_block_call(params, x2d, out_dtype):
    # Whole (small) array as one block: block == full array dims, so any
    # (rows, cols) — even rows % 8 != 0 or cols % 128 != 0 — is legal.
    r, c = x2d.shape
    return pl.pallas_call(
        _beta_linear_kernel,
        out_shape=jax.ShapeDtypeStruct((r, c), out_dtype),
        grid_spec=pltpu.PrefetchScalarGridSpec(
            num_scalar_prefetch=1,
            grid=(1,),
            in_specs=[pl.BlockSpec((r, c), lambda i, p: (0, 0))],
            out_specs=pl.BlockSpec((r, c), lambda i, p: (0, 0)),
        ),
        compiler_params=pltpu.CompilerParams(dimension_semantics=("arbitrary",)),
        cost_estimate=_cost(r * c, x2d.dtype, out_dtype),
    )(params, x2d)


def _tiled_call(params, x2d, out_dtype, block_shape, index_map, grid_len):
    def run(sem):
        return pl.pallas_call(
            _beta_linear_kernel,
            out_shape=jax.ShapeDtypeStruct(x2d.shape, out_dtype),
            grid_spec=pltpu.PrefetchScalarGridSpec(
                num_scalar_prefetch=1,
                grid=(grid_len,),
                in_specs=[pl.BlockSpec(block_shape, index_map)],
                out_specs=pl.BlockSpec(block_shape, index_map),
            ),
            compiler_params=pltpu.CompilerParams(
                dimension_semantics=(sem,),
                vmem_limit_bytes=_VMEM_LIMIT_BYTES,
            ),
            cost_estimate=_cost(x2d.size, x2d.dtype, out_dtype),
        )(params, x2d)

    try:
        # CORE_PARALLEL actually shards the streaming axis across v7x's two
        # TensorCores (plain "parallel" does not change codegen); harmless
        # no-op on single-TC v5e/v6e.
        return run(pltpu.CORE_PARALLEL)
    except Exception:
        return run("arbitrary")


def _row_tiled_call(params, x2d, out_dtype, tile_rows):
    rows, cols = x2d.shape
    return _tiled_call(params, x2d, out_dtype, (tile_rows, cols),
                       lambda i, p: (i, 0), pl.cdiv(rows, tile_rows))


def _lane_tiled_call(params, x2d, out_dtype, tile_cols):
    rows, cols = x2d.shape
    return _tiled_call(params, x2d, out_dtype, (rows, tile_cols),
                       lambda i, p: (0, i), pl.cdiv(cols, tile_cols))


def beta_linear_forward(t: jax.Array, start, end) -> jax.Array:
    """BetaLinear.forward via Pallas TPU kernels.

    Preserves the shape of `t`; floating dtypes are preserved, integer/bool
    inputs promote to float32 (PyTorch type-promotion semantics).
    `start`/`end` may be Python floats or traced scalar arrays.
    """
    orig_shape = t.shape
    in_dtype = t.dtype
    out_dtype = in_dtype if jnp.issubdtype(in_dtype, jnp.floating) else jnp.float32

    n = t.size
    if n == 0:
        return t.astype(out_dtype)

    # start/end live in SMEM via scalar prefetch: one compile covers every
    # (start, end) pair and traced scalars are accepted (no float()).
    params = jnp.stack([
        jnp.asarray(start, dtype=jnp.float32).reshape(()),
        jnp.asarray(end, dtype=jnp.float32).reshape(()),
    ])

    itemsize = max(_itemsize(in_dtype), _itemsize(out_dtype))
    small = n * itemsize <= _SINGLE_BLOCK_MAX_BYTES

    # ---- Path A: total size is lane-aligned -> free (n/128, 128) view. -------
    if n % _LANES == 0:
        x2d = t.reshape(-1, _LANES)
        if small:
            out = _single_block_call(params, x2d, out_dtype)
        else:
            out = _row_tiled_call(params, x2d, out_dtype, _TILE_ROWS)
        return out.reshape(orig_shape)

    # ---- Path B: keep a wide trailing dim as lanes (free reshape, no pad). ---
    last = orig_shape[-1] if len(orig_shape) >= 1 else 1
    if len(orig_shape) >= 2 and last >= _LANES and 8 * last * itemsize <= _TILE_BYTES:
        x2d = t.reshape(-1, last)
        if small:
            out = _single_block_call(params, x2d, out_dtype)
        else:
            rows = x2d.shape[0]
            tile_rows = min(rows, max(8, (_TILE_BYTES // (last * itemsize)) // 8 * 8))
            out = _row_tiled_call(params, x2d, out_dtype, tile_rows)
        return out.reshape(orig_shape)

    # ---- Path C: effectively 1-D and unaligned. ------------------------------
    flat = t.reshape(-1)
    if small:
        # Pad only the <=127-element tail so the single block is a
        # sublane/lane-dense (rows, 128) slab instead of a (1, n) strip.
        rows = pl.cdiv(n, _LANES)
        pad = rows * _LANES - n
        slab = jnp.pad(flat, (0, pad)).reshape(rows, _LANES)
        out = _single_block_call(params, slab, out_dtype)
        return out.reshape(-1)[:n].reshape(orig_shape)

    # Large & unaligned 1-D: tile the (1, n) view along lanes; the ragged tail
    # is handled by Pallas block-boundary masking -> exactly one HBM pass,
    # no pad / slice / concat round trips.
    out = _lane_tiled_call(params, flat.reshape(1, n), out_dtype, _LANE_TILE_COLS)
    return out.reshape(orig_shape)


if __name__ == "__main__":
    # BetaLinear has no learned parameters; start/end are constructor floats.
    start, end = 1e-4, 2e-2
    key = jax.random.PRNGKey(0)
    k0, k1, k2, k3, k4, k5 = jax.random.split(key, 6)

    def ref_fn(x):
        x32 = x.astype(jnp.float32)
        return start * (1.0 - x32) + end * x32

    # 1) Typical diffusion call: tiny 1-D batch of timesteps.
    t_small = jax.random.uniform(k0, (8,), dtype=jnp.float32)
    o = jax.block_until_ready(beta_linear_forward(t_small, start, end))
    assert o.shape == t_small.shape and o.dtype == t_small.dtype
    assert jnp.allclose(o, ref_fn(t_small), atol=1e-6, rtol=1e-6)

    # 2) 128-aligned 1-D -> lane-dense (rows, 128) single-block path.
    t_al = jax.random.uniform(k1, (2048,), dtype=jnp.float32)
    o = jax.block_until_ready(beta_linear_forward(t_al, start, end))
    assert o.shape == t_al.shape
    assert jnp.allclose(o, ref_fn(t_al), atol=1e-6, rtol=1e-6)

    # 3) Unaligned 2-D with narrow last dim -> tail-padded (rows, 128) block.
    t_odd = jax.random.uniform(k2, (3, 100), dtype=jnp.float32)
    o = jax.block_until_ready(beta_linear_forward(t_odd, start, end))
    assert o.shape == t_odd.shape
    assert jnp.allclose(o, ref_fn(t_odd), atol=1e-6, rtol=1e-6)

    # 4) Unaligned 2-D with wide last dim -> pad-free (rows, C) full block.
    t_wide = jax.random.uniform(k3, (7, 160), dtype=jnp.float32)
    o = jax.block_until_ready(beta_linear_forward(t_wide, start, end))
    assert o.shape == t_wide.shape
    assert jnp.allclose(o, ref_fn(t_wide), atol=1e-6, rtol=1e-6)

    # 5) Native bf16 I/O preserved (compute in f32 on the vreg).
    t_bf16 = t_small.astype(jnp.bfloat16)
    o = jax.block_until_ready(beta_linear_forward(t_bf16, start, end))
    assert o.shape == t_bf16.shape and o.dtype == jnp.bfloat16
    assert jnp.allclose(o.astype(jnp.float32), ref_fn(t_bf16), atol=1e-3, rtol=1e-2)

    # 6) Integer timesteps promote to float32 (PyTorch type-promotion semantics).
    t_int = jnp.arange(16, dtype=jnp.int32)
    o = jax.block_until_ready(beta_linear_forward(t_int, start, end))
    assert o.shape == t_int.shape and o.dtype == jnp.float32
    assert jnp.allclose(o, ref_fn(t_int), atol=1e-6, rtol=1e-6)

    # 7) Aligned streaming path: row-tiled 4 MiB blocks, CORE_PARALLEL grid.
    t_big = jax.random.uniform(k4, (1280, 1024), dtype=jnp.float32)
    o = jax.block_until_ready(beta_linear_forward(t_big, start, end))
    assert o.shape == t_big.shape
    assert jnp.allclose(o, ref_fn(t_big), atol=1e-6, rtol=1e-6)

    # 8) Large unaligned 1-D: lane-tiled single-pass path with masked ragged tail.
    t_rag = jax.random.uniform(k5, (700_001,), dtype=jnp.float32)
    o = jax.block_until_ready(beta_linear_forward(t_rag, start, end))
    assert o.shape == t_rag.shape
    assert jnp.allclose(o, ref_fn(t_rag), atol=1e-6, rtol=1e-6)

    print("KERNEL_OK")
</pallas_src>

<mosaic_0001>
module attributes {stable_mosaic.version = 11 : i64} {
  func.func @_beta_linear_kernel(%arg0: i32, %arg1: memref<2xf32, #tpu.memory_space<smem>>, %arg2: memref<1x128xf32, #tpu.memory_space<vmem>>, %arg3: memref<1x128xf32, #tpu.memory_space<vmem>>) attributes {dimension_semantics = [#tpu.dimension_semantics<arbitrary>], iteration_bounds = array<i64: 1>, scalar_prefetch = 1 : i64, scratch_operands = 0 : i64, tpu.core_type = #tpu.core_type<tc>, window_params = [{pipeline_mode = #tpu.pipeline_mode<synchronous>, transform_indices = @transform_0, window_bounds = array<i64: 1, 128>}, {pipeline_mode = #tpu.pipeline_mode<synchronous>, transform_indices = @transform_1, window_bounds = array<i64: 1, 128>}]} {
    %c0 = arith.constant 0 : index
    %0 = memref.load %arg1[%c0] : memref<2xf32, #tpu.memory_space<smem>>
    %c1 = arith.constant 1 : index
    %1 = memref.load %arg1[%c1] : memref<2xf32, #tpu.memory_space<smem>>
    %c0_0 = arith.constant 0 : index
    %c0_1 = arith.constant 0 : index
    %2 = vector.load %arg2[%c0_0, %c0_1] : memref<1x128xf32, #tpu.memory_space<vmem>>, vector<1x128xf32>
    %3 = arith.subf %1, %0 : f32
    %4 = vector.broadcast %3 : f32 to vector<1x128xf32>
    %5 = arith.mulf %4, %2 : vector<1x128xf32>
    %6 = vector.broadcast %0 : f32 to vector<1x128xf32>
    %7 = arith.addf %6, %5 : vector<1x128xf32>
    %c0_2 = arith.constant 0 : index
    %c0_3 = arith.constant 0 : index
    %8 = vector.load %arg3[%c0_2, %c0_3] : memref<1x128xf32, #tpu.memory_space<vmem>>, vector<1x128xf32>
    tpu.vector_store %arg3[%c0_2, %c0_3], %7 {strides = array<i32>} : memref<1x128xf32, #tpu.memory_space<vmem>>, vector<1x128xf32>,
    return
  }
  func.func @transform_0(%arg0: i32, %arg1: memref<2xf32, #tpu.memory_space<smem>>) -> (i32, i32) {
    %c0_i32 = arith.constant 0 : i32
    %c0_i32_0 = arith.constant 0 : i32
    %c0_i32_1 = arith.constant 0 : i32
    return %c0_i32, %c0_i32_0 : i32, i32
  }
  func.func @transform_1(%arg0: i32, %arg1: memref<2xf32, #tpu.memory_space<smem>>) -> (i32, i32) {
    %c0_i32 = arith.constant 0 : i32
    %c0_i32_0 = arith.constant 0 : i32
    %c0_i32_1 = arith.constant 0 : i32
    return %c0_i32, %c0_i32_0 : i32, i32
  }
}

</mosaic_0001>

<llo_original>
// kernel: tpu_custom_call.1
$region0: #{tpu_custom_call.1}
  #allocation0 [shape = 'u32[]', space=smem, size = 0x4, offset = 0x4, fixed_abs, tag = 'smem constant byte address 0x4 - core index']
  #allocation1 [shape = 'u32[144,128]{1,0:T(1,128)}', space=vmem, size = 0x12000, scoped, tag = 'internal scratch']
  #allocation2 [shape = 's32[1]{0}', space=sflag, size = 0x4, scoped, tag = 'scoped memory for tpu_custom_call.1']
  #allocation3 [shape = 'u8[512]{0}', space=smem, size = 0x200, scoped, tag = 'prefetched SMEM operand 0']
  %s0 = inlined_call_operand.hbm [shape: f32[2], index: 0, kind: input, shape index: {}]
  %s1 = inlined_call_operand.vmem [shape: f32[1,128], index: 1, kind: input, shape index: {}]
  %s2 = inlined_call_operand.hbm [shape: f32[1,128], index: 2, kind: output, shape index: {}]
  %s3 = sld [smem:[#allocation0]]
  $region14: #{tpu_custom_call.1} parent=0
    _
  %s5 = ssub.s32 1, %s3
  %s6 = scalar_select 0, %s5, %s3
  %8 = dma.hbm_to_smem %s0, 16, [#allocation3], [#allocation2]
  %9 = dma.done [#allocation2], 16
  %10 = sfence
  $region1: #{tpu_custom_call.1} parent=0
    #allocation4 [shape = 'u8[512]{0}', space=vmem, size = 0x400, scoped, tag = 'output window, operand 0, single buffered']
    #allocation5 [shape = 's32[1]{0}', space=sflag, size = 0x4, scoped, tag = 'scoped memory for tpu_custom_call.1']
    %11 = vsyncpa [#allocation5], 0
    // Predicated region
    $region2: #{tpu_custom_call.1} parent=1 // pred_check
      _
    $region3: #{tpu_custom_call.1} parent=1 // pred_check_branch
      %13 = sbr.rel (0) target = $region5
    $region4: #{tpu_custom_call.1} parent=1 // pred_region
      _
    $region5: #{tpu_custom_call.1} parent=1 // pred_fallthru
      _
    %s14 = sld [smem:[#allocation3]]
    %s15 = sld [smem:[#allocation3 + $0x1]]
    %v16 = vld [vmem:[%s1] sm:$0x1]
    %s17 = ssub.f32 %s15, %s14
    %v18 = vstv %s17
    %v19 = vmul.f32 %v18, %v16
    %v20 = vstv %s14
    %v21 = vadd.f32 %v20, %v19
    %22 = vst [vmem:[#allocation4] sm:$0x1] %v21
    // Predicated region
    $region6: #{tpu_custom_call.1} parent=1 // pred_check
      _
    $region7: #{tpu_custom_call.1} parent=1 // pred_check_branch
      %24 = sbr.rel (0) target = $region9
    $region8: #{tpu_custom_call.1} parent=1 // pred_region
      %s26 = ssub.s32 16, 16
      %27 = vsyncadd [#allocation5], %s26
      %s29 = sshll.u32 [#allocation4], 4
      %s30 = int_to_ptr.vmem [resolvable:$true] %s29
      %32 = dma.vmem_to_hbm [thread:$0]  %s30, 16, %s2, [#allocation5]
    $region9: #{tpu_custom_call.1} parent=1 // pred_fallthru
      _
    // Predicated region
    $region10: #{tpu_custom_call.1} parent=1 // pred_check
      _
    $region11: #{tpu_custom_call.1} parent=1 // pred_check_branch
      %34 = sbr.rel (0) target = $region13
    $region12: #{tpu_custom_call.1} parent=1 // pred_region
      %35 = dma.done [#allocation5], 16
    $region13: #{tpu_custom_call.1} parent=1 // pred_fallthru
      _
    %36 = vsyncpa [#allocation5], 1

</llo_original>
